<compile_context>
chip_gen: v5e
topology: v5e:2x2
jax: 0.10.0
libtpu: 0.0.40
codegen_flags: <defaults>
</compile_context>

<pallas_src>
import jax
import jax.numpy as jnp
from jax.experimental import pallas as pl
from jax.experimental.pallas import tpu as pltpu


def alpha_kernel(src_ref, dst_ref, s_ref, o_ref, acc_ref):
    # src_ref: (8, TE) i32   combined node id of the source (in [0, N_pad))
    # dst_ref: (8, TE) i32   combined node id of the dest   (in [N_pad, 2*N_pad))
    # s_ref  : (1, TN) f32   block of the concatenated score row s01 = [s0 | s1]
    # o_ref  : (8, TE) f32   edge attention logits (sublane+lane dense)
    # acc_ref: (8, TE) f32   accumulator across node blocks
    k = pl.program_id(1)

    @pl.when(k == 0)
    def _init():
        acc_ref[...] = jnp.zeros_like(acc_ref)

    TN = s_ref.shape[1]
    TE = src_ref.shape[1]

    s_blk = s_ref[...]                                                   # (1, TN) f32
    # Global combined-node ids covered by this node block.
    iota_g = jax.lax.broadcasted_iota(jnp.int32, (TN, TE), 0) + k * TN   # (TN, TE)

    # 8 sublane rows of the edge block; each row is one lane-dense (1, TE) MXU matvec.
    # (static Python unroll -> 8 small matmuls, intermediates bounded to (TN, TE))
    for r in range(src_ref.shape[0]):
        src_r = src_ref[r:r + 1, :]                                      # (1, TE)
        dst_r = dst_ref[r:r + 1, :]                                      # (1, TE)
        # Exact one-hot: src/dst live in disjoint halves of the combined node axis,
        # so the OR never collides and each valid edge column sums exactly two scores.
        onehot = ((iota_g == src_r) | (iota_g == dst_r)).astype(jnp.float32)
        acc_ref[r:r + 1, :] += jnp.dot(s_blk, onehot,
                                       preferred_element_type=jnp.float32)

    @pl.when(k == pl.num_programs(1) - 1)
    def _finalize():
        e = acc_ref[...]
        # LeakyReLU(negative_slope=0.2), full (8, TE) unmasked store.
        o_ref[...] = jnp.where(e > 0.0, e, 0.2 * e)


def alpha_calculation(x, edge_index, attention_vector, *, edge_tile=512, node_tile=256):
    """x: (N, C), edge_index: (2, E) int, attention_vector: (2C,) -> (E, 1) f32."""
    N, C = x.shape
    E = edge_index.shape[1]

    # ---- hoisted per-node scores (tiny XLA matvec, done once, f32) ----
    a2 = attention_vector.astype(jnp.float32).reshape(2, C)              # rows: a[:C], a[C:]
    s = jnp.dot(x.astype(jnp.float32), a2.T)                             # (N, 2) f32

    # Node tiling: TN multiple of 128; N_pad multiple of TN so node blocks never
    # straddle the [s0 | s1] boundary and TN | 2*N_pad exactly.
    node_tile = max(128, (node_tile // 128) * 128)
    TN = min(node_tile, pl.cdiv(N, 128) * 128)
    N_pad = pl.cdiv(N, TN) * TN
    s_pad = jnp.zeros((2, N_pad), jnp.float32).at[:, :N].set(s.T)
    s01 = s_pad.reshape(1, 2 * N_pad)                                    # [s0 | s1], lane-dense
    n_nblk = (2 * N_pad) // TN

    # ---- edge blocking: (8, TE) edges per grid step ----
    edge_tile = max(128, (edge_tile // 128) * 128)
    TE = min(edge_tile, max(128, pl.cdiv(E, 128) * 128))
    EB = 8 * TE
    n_eblk = pl.cdiv(E, EB)
    if n_eblk > 1:
        n_eblk += n_eblk % 2          # even # of edge blocks -> balanced megacore split
    E_pad = n_eblk * EB

    ei = edge_index.astype(jnp.int32)
    src = jnp.zeros((E_pad,), jnp.int32).at[:E].set(ei[0])                # pad -> node 0 (sliced off)
    dst_g = jnp.full((E_pad,), N_pad, jnp.int32).at[:E].set(ei[1] + N_pad)
    src2 = src.reshape(n_eblk * 8, TE)
    dst2 = dst_g.reshape(n_eblk * 8, TE)

    out = pl.pallas_call(
        alpha_kernel,
        out_shape=jax.ShapeDtypeStruct((n_eblk * 8, TE), jnp.float32),
        grid=(n_eblk, n_nblk),                                            # node (reduction) axis last
        in_specs=[
            pl.BlockSpec((8, TE), lambda i, k: (i, 0)),                   # src ids
            pl.BlockSpec((8, TE), lambda i, k: (i, 0)),                   # dst ids
            pl.BlockSpec((1, TN), lambda i, k: (0, k)),                   # score block
        ],
        out_specs=pl.BlockSpec((8, TE), lambda i, k: (i, 0)),             # accumulated output
        scratch_shapes=[pltpu.VMEM((8, TE), jnp.float32)],
        compiler_params=pltpu.CompilerParams(
            dimension_semantics=("parallel", "arbitrary"),
            vmem_limit_bytes=32 * 1024 * 1024),
    )(src2, dst2, s01)

    return out.reshape(E_pad)[:E].reshape(E, 1)


if __name__ == "__main__":
    key = jax.random.PRNGKey(0)
    k_x, k_a, k_e = jax.random.split(key, 3)

    N, C, E = 16, 8, 32  # nodes, in_channels, edges

    x = jax.random.normal(k_x, (N, C), dtype=jnp.float32)
    attention_vector = jax.random.normal(k_a, (2 * C,), dtype=jnp.float32)  # randn(in_channels*2)
    edge_index = jax.random.randint(k_e, (2, E), 0, N, dtype=jnp.int32)

    out = alpha_calculation(x, edge_index, attention_vector)
    jax.block_until_ready(out)

    # Pure-JAX reference (mirrors the PyTorch forward).
    ef = jnp.concatenate([x[edge_index[0]], x[edge_index[1]]], axis=1)      # (E, 2C)
    e_ref = jnp.sum(ef * attention_vector[None, :], axis=1)
    e_ref = jnp.where(e_ref > 0, e_ref, 0.2 * e_ref).reshape(-1, 1)

    assert out.shape == (E, 1), out.shape
    assert jnp.allclose(out, e_ref, atol=1e-5, rtol=1e-5), "mismatch vs reference"

    print("KERNEL_OK")
</pallas_src>

<mosaic_0001>
module attributes {stable_mosaic.version = 11 : i64} {
  func.func @alpha_kernel(%arg0: i32, %arg1: i32, %arg2: memref<8x128xi32, #tpu.memory_space<vmem>>, %arg3: memref<8x128xi32, #tpu.memory_space<vmem>>, %arg4: memref<1x128xf32, #tpu.memory_space<vmem>>, %arg5: memref<8x128xf32, #tpu.memory_space<vmem>>, %arg6: memref<8x128xf32, #tpu.memory_space<vmem>>) attributes {dimension_semantics = [#tpu.dimension_semantics<parallel>, #tpu.dimension_semantics<arbitrary>], iteration_bounds = array<i64: 1, 2>, scalar_prefetch = 0 : i64, scratch_operands = 1 : i64, tpu.core_type = #tpu.core_type<tc>, window_params = [{transform_indices = @transform_0, window_bounds = array<i64: 8, 128>}, {transform_indices = @transform_1, window_bounds = array<i64: 8, 128>}, {transform_indices = @transform_2, window_bounds = array<i64: 1, 128>}, {transform_indices = @transform_3, window_bounds = array<i64: 8, 128>}]} {
    %c0_i32 = arith.constant 0 : i32
    %0 = arith.cmpi eq, %arg1, %c0_i32 : i32
    %1 = arith.extui %0 : i1 to i32
    %c0_i32_0 = arith.constant 0 : i32
    %2 = arith.cmpi ne, %1, %c0_i32_0 : i32
    scf.if %2 {
      %cst_67 = arith.constant 0.000000e+00 : f32
      %115 = vector.broadcast %cst_67 : f32 to vector<8x128xf32>
      %c0_68 = arith.constant 0 : index
      %c0_69 = arith.constant 0 : index
      %116 = vector.load %arg6[%c0_68, %c0_69] : memref<8x128xf32, #tpu.memory_space<vmem>>, vector<8x128xf32>
      tpu.vector_store %arg6[%c0_68, %c0_69], %115 {strides = array<i32>} : memref<8x128xf32, #tpu.memory_space<vmem>>, vector<8x128xf32>,
    } else {
    }
    %c0 = arith.constant 0 : index
    %c0_1 = arith.constant 0 : index
    %3 = vector.load %arg4[%c0, %c0_1] : memref<1x128xf32, #tpu.memory_space<vmem>>, vector<1x128xf32>
    %4 = tpu.iota {dimensions = array<i32: 0>} : vector<128x128xi32>
    %c128_i32 = arith.constant 128 : i32
    %5 = arith.muli %arg1, %c128_i32 : i32
    %6 = vector.broadcast %5 : i32 to vector<128x128xi32>
    %7 = arith.addi %4, %6 : vector<128x128xi32>
    %c0_2 = arith.constant 0 : index
    %c0_3 = arith.constant 0 : index
    %8 = vector.load %arg2[%c0_2, %c0_3] : memref<8x128xi32, #tpu.memory_space<vmem>>, vector<1x128xi32>
    %c0_4 = arith.constant 0 : index
    %c0_5 = arith.constant 0 : index
    %9 = vector.load %arg3[%c0_4, %c0_5] : memref<8x128xi32, #tpu.memory_space<vmem>>, vector<1x128xi32>
    %10 = vector.broadcast %8 : vector<1x128xi32> to vector<128x128xi32>
    %11 = arith.cmpi eq, %7, %10 : vector<128x128xi32>
    %12 = vector.broadcast %9 : vector<1x128xi32> to vector<128x128xi32>
    %13 = arith.cmpi eq, %7, %12 : vector<128x128xi32>
    %14 = arith.ori %11, %13 : vector<128x128xi1>
    %15 = arith.extui %14 : vector<128x128xi1> to vector<128x128xi32>
    %16 = arith.sitofp %15 : vector<128x128xi32> to vector<128x128xf32>
    %c0_6 = arith.constant 0 : index
    %c0_7 = arith.constant 0 : index
    %17 = vector.load %arg6[%c0_6, %c0_7] : memref<8x128xf32, #tpu.memory_space<vmem>>, vector<1x128xf32>
    %cst = arith.constant dense<0.000000e+00> : vector<1x128xf32>
    %18 = tpu.matmul %3, %16, %cst {dimension_numbers = #tpu.dot_dimension_numbers<[1], [0], [0], [1], [0, 0, 1, 1], [], []>} : vector<1x128xf32>, vector<128x128xf32>, vector<1x128xf32> -> vector<1x128xf32>
    %19 = arith.addf %17, %18 : vector<1x128xf32>
    %c0_8 = arith.constant 0 : index
    %c0_9 = arith.constant 0 : index
    %20 = vector.load %arg6[%c0_8, %c0_9] : memref<8x128xf32, #tpu.memory_space<vmem>>, vector<1x128xf32>
    tpu.vector_store %arg6[%c0_8, %c0_9], %19 {strides = array<i32>} : memref<8x128xf32, #tpu.memory_space<vmem>>, vector<1x128xf32>,
    %c1 = arith.constant 1 : index
    %c0_10 = arith.constant 0 : index
    %21 = vector.load %arg2[%c1, %c0_10] : memref<8x128xi32, #tpu.memory_space<vmem>>, vector<1x128xi32>
    %c1_11 = arith.constant 1 : index
    %c0_12 = arith.constant 0 : index
    %22 = vector.load %arg3[%c1_11, %c0_12] : memref<8x128xi32, #tpu.memory_space<vmem>>, vector<1x128xi32>
    %23 = vector.broadcast %21 : vector<1x128xi32> to vector<128x128xi32>
    %24 = arith.cmpi eq, %7, %23 : vector<128x128xi32>
    %25 = vector.broadcast %22 : vector<1x128xi32> to vector<128x128xi32>
    %26 = arith.cmpi eq, %7, %25 : vector<128x128xi32>
    %27 = arith.ori %24, %26 : vector<128x128xi1>
    %28 = arith.extui %27 : vector<128x128xi1> to vector<128x128xi32>
    %29 = arith.sitofp %28 : vector<128x128xi32> to vector<128x128xf32>
    %c1_13 = arith.constant 1 : index
    %c0_14 = arith.constant 0 : index
    %30 = vector.load %arg6[%c1_13, %c0_14] : memref<8x128xf32, #tpu.memory_space<vmem>>, vector<1x128xf32>
    %cst_15 = arith.constant dense<0.000000e+00> : vector<1x128xf32>
    %31 = tpu.matmul %3, %29, %cst_15 {dimension_numbers = #tpu.dot_dimension_numbers<[1], [0], [0], [1], [0, 0, 1, 1], [], []>} : vector<1x128xf32>, vector<128x128xf32>, vector<1x128xf32> -> vector<1x128xf32>
    %32 = arith.addf %30, %31 : vector<1x128xf32>
    %c1_16 = arith.constant 1 : index
    %c0_17 = arith.constant 0 : index
    %33 = vector.load %arg6[%c1_16, %c0_17] : memref<8x128xf32, #tpu.memory_space<vmem>>, vector<1x128xf32>
    tpu.vector_store %arg6[%c1_16, %c0_17], %32 {strides = array<i32>} : memref<8x128xf32, #tpu.memory_space<vmem>>, vector<1x128xf32>,
    %c2 = arith.constant 2 : index
    %c0_18 = arith.constant 0 : index
    %34 = vector.load %arg2[%c2, %c0_18] : memref<8x128xi32, #tpu.memory_space<vmem>>, vector<1x128xi32>
    %c2_19 = arith.constant 2 : index
    %c0_20 = arith.constant 0 : index
    %35 = vector.load %arg3[%c2_19, %c0_20] : memref<8x128xi32, #tpu.memory_space<vmem>>, vector<1x128xi32>
    %36 = vector.broadcast %34 : vector<1x128xi32> to vector<128x128xi32>
    %37 = arith.cmpi eq, %7, %36 : vector<128x128xi32>
    %38 = vector.broadcast %35 : vector<1x128xi32> to vector<128x128xi32>
    %39 = arith.cmpi eq, %7, %38 : vector<128x128xi32>
    %40 = arith.ori %37, %39 : vector<128x128xi1>
    %41 = arith.extui %40 : vector<128x128xi1> to vector<128x128xi32>
    %42 = arith.sitofp %41 : vector<128x128xi32> to vector<128x128xf32>
    %c2_21 = arith.constant 2 : index
    %c0_22 = arith.constant 0 : index
    %43 = vector.load %arg6[%c2_21, %c0_22] : memref<8x128xf32, #tpu.memory_space<vmem>>, vector<1x128xf32>
    %cst_23 = arith.constant dense<0.000000e+00> : vector<1x128xf32>
    %44 = tpu.matmul %3, %42, %cst_23 {dimension_numbers = #tpu.dot_dimension_numbers<[1], [0], [0], [1], [0, 0, 1, 1], [], []>} : vector<1x128xf32>, vector<128x128xf32>, vector<1x128xf32> -> vector<1x128xf32>
    %45 = arith.addf %43, %44 : vector<1x128xf32>
    %c2_24 = arith.constant 2 : index
    %c0_25 = arith.constant 0 : index
    %46 = vector.load %arg6[%c2_24, %c0_25] : memref<8x128xf32, #tpu.memory_space<vmem>>, vector<1x128xf32>
    tpu.vector_store %arg6[%c2_24, %c0_25], %45 {strides = array<i32>} : memref<8x128xf32, #tpu.memory_space<vmem>>, vector<1x128xf32>,
    %c3 = arith.constant 3 : index
    %c0_26 = arith.constant 0 : index
    %47 = vector.load %arg2[%c3, %c0_26] : memref<8x128xi32, #tpu.memory_space<vmem>>, vector<1x128xi32>
    %c3_27 = arith.constant 3 : index
    %c0_28 = arith.constant 0 : index
    %48 = vector.load %arg3[%c3_27, %c0_28] : memref<8x128xi32, #tpu.memory_space<vmem>>, vector<1x128xi32>
    %49 = vector.broadcast %47 : vector<1x128xi32> to vector<128x128xi32>
    %50 = arith.cmpi eq, %7, %49 : vector<128x128xi32>
    %51 = vector.broadcast %48 : vector<1x128xi32> to vector<128x128xi32>
    %52 = arith.cmpi eq, %7, %51 : vector<128x128xi32>
    %53 = arith.ori %50, %52 : vector<128x128xi1>
    %54 = arith.extui %53 : vector<128x128xi1> to vector<128x128xi32>
    %55 = arith.sitofp %54 : vector<128x128xi32> to vector<128x128xf32>
    %c3_29 = arith.constant 3 : index
    %c0_30 = arith.constant 0 : index
    %56 = vector.load %arg6[%c3_29, %c0_30] : memref<8x128xf32, #tpu.memory_space<vmem>>, vector<1x128xf32>
    %cst_31 = arith.constant dense<0.000000e+00> : vector<1x128xf32>
    %57 = tpu.matmul %3, %55, %cst_31 {dimension_numbers = #tpu.dot_dimension_numbers<[1], [0], [0], [1], [0, 0, 1, 1], [], []>} : vector<1x128xf32>, vector<128x128xf32>, vector<1x128xf32> -> vector<1x128xf32>
    %58 = arith.addf %56, %57 : vector<1x128xf32>
    %c3_32 = arith.constant 3 : index
    %c0_33 = arith.constant 0 : index
    %59 = vector.load %arg6[%c3_32, %c0_33] : memref<8x128xf32, #tpu.memory_space<vmem>>, vector<1x128xf32>
    tpu.vector_store %arg6[%c3_32, %c0_33], %58 {strides = array<i32>} : memref<8x128xf32, #tpu.memory_space<vmem>>, vector<1x128xf32>,
    %c4 = arith.constant 4 : index
    %c0_34 = arith.constant 0 : index
    %60 = vector.load %arg2[%c4, %c0_34] : memref<8x128xi32, #tpu.memory_space<vmem>>, vector<1x128xi32>
    %c4_35 = arith.constant 4 : index
    %c0_36 = arith.constant 0 : index
    %61 = vector.load %arg3[%c4_35, %c0_36] : memref<8x128xi32, #tpu.memory_space<vmem>>, vector<1x128xi32>
    %62 = vector.broadcast %60 : vector<1x128xi32> to vector<128x128xi32>
    %63 = arith.cmpi eq, %7, %62 : vector<128x128xi32>
    %64 = vector.broadcast %61 : vector<1x128xi32> to vector<128x128xi32>
    %65 = arith.cmpi eq, %7, %64 : vector<128x128xi32>
    %66 = arith.ori %63, %65 : vector<128x128xi1>
    %67 = arith.extui %66 : vector<128x128xi1> to vector<128x128xi32>
    %68 = arith.sitofp %67 : vector<128x128xi32> to vector<128x128xf32>
    %c4_37 = arith.constant 4 : index
    %c0_38 = arith.constant 0 : index
    %69 = vector.load %arg6[%c4_37, %c0_38] : memref<8x128xf32, #tpu.memory_space<vmem>>, vector<1x128xf32>
    %cst_39 = arith.constant dense<0.000000e+00> : vector<1x128xf32>
    %70 = tpu.matmul %3, %68, %cst_39 {dimension_numbers = #tpu.dot_dimension_numbers<[1], [0], [0], [1], [0, 0, 1, 1], [], []>} : vector<1x128xf32>, vector<128x128xf32>, vector<1x128xf32> -> vector<1x128xf32>
    %71 = arith.addf %69, %70 : vector<1x128xf32>
    %c4_40 = arith.constant 4 : index
    %c0_41 = arith.constant 0 : index
    %72 = vector.load %arg6[%c4_40, %c0_41] : memref<8x128xf32, #tpu.memory_space<vmem>>, vector<1x128xf32>
    tpu.vector_store %arg6[%c4_40, %c0_41], %71 {strides = array<i32>} : memref<8x128xf32, #tpu.memory_space<vmem>>, vector<1x128xf32>,
    %c5 = arith.constant 5 : index
    %c0_42 = arith.constant 0 : index
    %73 = vector.load %arg2[%c5, %c0_42] : memref<8x128xi32, #tpu.memory_space<vmem>>, vector<1x128xi32>
    %c5_43 = arith.constant 5 : index
    %c0_44 = arith.constant 0 : index
    %74 = vector.load %arg3[%c5_43, %c0_44] : memref<8x128xi32, #tpu.memory_space<vmem>>, vector<1x128xi32>
    %75 = vector.broadcast %73 : vector<1x128xi32> to vector<128x128xi32>
    %76 = arith.cmpi eq, %7, %75 : vector<128x128xi32>
    %77 = vector.broadcast %74 : vector<1x128xi32> to vector<128x128xi32>
    %78 = arith.cmpi eq, %7, %77 : vector<128x128xi32>
    %79 = arith.ori %76, %78 : vector<128x128xi1>
    %80 = arith.extui %79 : vector<128x128xi1> to vector<128x128xi32>
    %81 = arith.sitofp %80 : vector<128x128xi32> to vector<128x128xf32>
    %c5_45 = arith.constant 5 : index
    %c0_46 = arith.constant 0 : index
    %82 = vector.load %arg6[%c5_45, %c0_46] : memref<8x128xf32, #tpu.memory_space<vmem>>, vector<1x128xf32>
    %cst_47 = arith.constant dense<0.000000e+00> : vector<1x128xf32>
    %83 = tpu.matmul %3, %81, %cst_47 {dimension_numbers = #tpu.dot_dimension_numbers<[1], [0], [0], [1], [0, 0, 1, 1], [], []>} : vector<1x128xf32>, vector<128x128xf32>, vector<1x128xf32> -> vector<1x128xf32>
    %84 = arith.addf %82, %83 : vector<1x128xf32>
    %c5_48 = arith.constant 5 : index
    %c0_49 = arith.constant 0 : index
    %85 = vector.load %arg6[%c5_48, %c0_49] : memref<8x128xf32, #tpu.memory_space<vmem>>, vector<1x128xf32>
    tpu.vector_store %arg6[%c5_48, %c0_49], %84 {strides = array<i32>} : memref<8x128xf32, #tpu.memory_space<vmem>>, vector<1x128xf32>,
    %c6 = arith.constant 6 : index
    %c0_50 = arith.constant 0 : index
    %86 = vector.load %arg2[%c6, %c0_50] : memref<8x128xi32, #tpu.memory_space<vmem>>, vector<1x128xi32>
    %c6_51 = arith.constant 6 : index
    %c0_52 = arith.constant 0 : index
    %87 = vector.load %arg3[%c6_51, %c0_52] : memref<8x128xi32, #tpu.memory_space<vmem>>, vector<1x128xi32>
    %88 = vector.broadcast %86 : vector<1x128xi32> to vector<128x128xi32>
    %89 = arith.cmpi eq, %7, %88 : vector<128x128xi32>
    %90 = vector.broadcast %87 : vector<1x128xi32> to vector<128x128xi32>
    %91 = arith.cmpi eq, %7, %90 : vector<128x128xi32>
    %92 = arith.ori %89, %91 : vector<128x128xi1>
    %93 = arith.extui %92 : vector<128x128xi1> to vector<128x128xi32>
    %94 = arith.sitofp %93 : vector<128x128xi32> to vector<128x128xf32>
    %c6_53 = arith.constant 6 : index
    %c0_54 = arith.constant 0 : index
    %95 = vector.load %arg6[%c6_53, %c0_54] : memref<8x128xf32, #tpu.memory_space<vmem>>, vector<1x128xf32>
    %cst_55 = arith.constant dense<0.000000e+00> : vector<1x128xf32>
    %96 = tpu.matmul %3, %94, %cst_55 {dimension_numbers = #tpu.dot_dimension_numbers<[1], [0], [0], [1], [0, 0, 1, 1], [], []>} : vector<1x128xf32>, vector<128x128xf32>, vector<1x128xf32> -> vector<1x128xf32>
    %97 = arith.addf %95, %96 : vector<1x128xf32>
    %c6_56 = arith.constant 6 : index
    %c0_57 = arith.constant 0 : index
    %98 = vector.load %arg6[%c6_56, %c0_57] : memref<8x128xf32, #tpu.memory_space<vmem>>, vector<1x128xf32>
    tpu.vector_store %arg6[%c6_56, %c0_57], %97 {strides = array<i32>} : memref<8x128xf32, #tpu.memory_space<vmem>>, vector<1x128xf32>,
    %c7 = arith.constant 7 : index
    %c0_58 = arith.constant 0 : index
    %99 = vector.load %arg2[%c7, %c0_58] : memref<8x128xi32, #tpu.memory_space<vmem>>, vector<1x128xi32>
    %c7_59 = arith.constant 7 : index
    %c0_60 = arith.constant 0 : index
    %100 = vector.load %arg3[%c7_59, %c0_60] : memref<8x128xi32, #tpu.memory_space<vmem>>, vector<1x128xi32>
    %101 = vector.broadcast %99 : vector<1x128xi32> to vector<128x128xi32>
    %102 = arith.cmpi eq, %7, %101 : vector<128x128xi32>
    %103 = vector.broadcast %100 : vector<1x128xi32> to vector<128x128xi32>
    %104 = arith.cmpi eq, %7, %103 : vector<128x128xi32>
    %105 = arith.ori %102, %104 : vector<128x128xi1>
    %106 = arith.extui %105 : vector<128x128xi1> to vector<128x128xi32>
    %107 = arith.sitofp %106 : vector<128x128xi32> to vector<128x128xf32>
    %c7_61 = arith.constant 7 : index
    %c0_62 = arith.constant 0 : index
    %108 = vector.load %arg6[%c7_61, %c0_62] : memref<8x128xf32, #tpu.memory_space<vmem>>, vector<1x128xf32>
    %cst_63 = arith.constant dense<0.000000e+00> : vector<1x128xf32>
    %109 = tpu.matmul %3, %107, %cst_63 {dimension_numbers = #tpu.dot_dimension_numbers<[1], [0], [0], [1], [0, 0, 1, 1], [], []>} : vector<1x128xf32>, vector<128x128xf32>, vector<1x128xf32> -> vector<1x128xf32>
    %110 = arith.addf %108, %109 : vector<1x128xf32>
    %c7_64 = arith.constant 7 : index
    %c0_65 = arith.constant 0 : index
    %111 = vector.load %arg6[%c7_64, %c0_65] : memref<8x128xf32, #tpu.memory_space<vmem>>, vector<1x128xf32>
    tpu.vector_store %arg6[%c7_64, %c0_65], %110 {strides = array<i32>} : memref<8x128xf32, #tpu.memory_space<vmem>>, vector<1x128xf32>,
    %c1_i32 = arith.constant 1 : i32
    %112 = arith.cmpi eq, %arg1, %c1_i32 : i32
    %113 = arith.extui %112 : i1 to i32
    %c0_i32_66 = arith.constant 0 : i32
    %114 = arith.cmpi ne, %113, %c0_i32_66 : i32
    scf.if %114 {
      %c0_67 = arith.constant 0 : index
      %c0_68 = arith.constant 0 : index
      %115 = vector.load %arg6[%c0_67, %c0_68] : memref<8x128xf32, #tpu.memory_space<vmem>>, vector<8x128xf32>
      %cst_69 = arith.constant 0.000000e+00 : f32
      %116 = vector.broadcast %cst_69 : f32 to vector<8x128xf32>
      %117 = arith.cmpf ogt, %115, %116 : vector<8x128xf32>
      %cst_70 = arith.constant 2.000000e-01 : f32
      %118 = vector.broadcast %cst_70 : f32 to vector<8x128xf32>
      %119 = arith.mulf %118, %115 : vector<8x128xf32>
      %120 = arith.select %117, %115, %119 : vector<8x128xi1>, vector<8x128xf32>
      %c0_71 = arith.constant 0 : index
      %c0_72 = arith.constant 0 : index
      %121 = vector.load %arg5[%c0_71, %c0_72] : memref<8x128xf32, #tpu.memory_space<vmem>>, vector<8x128xf32>
      tpu.vector_store %arg5[%c0_71, %c0_72], %120 {strides = array<i32>} : memref<8x128xf32, #tpu.memory_space<vmem>>, vector<8x128xf32>,
    } else {
    }
    return
  }
  func.func @transform_0(%arg0: i32, %arg1: i32) -> (i32, i32) {
    %c0_i32 = arith.constant 0 : i32
    %c0_i32_0 = arith.constant 0 : i32
    return %arg0, %c0_i32 : i32, i32
  }
  func.func @transform_1(%arg0: i32, %arg1: i32) -> (i32, i32) {
    %c0_i32 = arith.constant 0 : i32
    %c0_i32_0 = arith.constant 0 : i32
    return %arg0, %c0_i32 : i32, i32
  }
  func.func @transform_2(%arg0: i32, %arg1: i32) -> (i32, i32) {
    %c0_i32 = arith.constant 0 : i32
    %c0_i32_0 = arith.constant 0 : i32
    return %c0_i32, %arg1 : i32, i32
  }
  func.func @transform_3(%arg0: i32, %arg1: i32) -> (i32, i32) {
    %c0_i32 = arith.constant 0 : i32
    %c0_i32_0 = arith.constant 0 : i32
    return %arg0, %c0_i32 : i32, i32
  }
}

</mosaic_0001>

<llo_original>
// kernel: tpu_custom_call.1
$region0: #{tpu_custom_call.1}
  #allocation0 [shape = 'u32[]', space=smem, size = 0x4, offset = 0x4, fixed_abs, tag = 'smem constant byte address 0x4 - core index']
  #allocation1 [shape = 'u32[72,128]{1,0:T(1,128)}', space=vmem, size = 0x9000, scoped, tag = 'internal scratch']
  #allocation2 [shape = 'f32[8,128]{1,0:T(8,128)}', space=vmem, size = 0x1000, scoped, tag = 'scratch operand']
  %s0 = inlined_call_operand.hbm [shape: s32[8,128], index: 0, kind: input, shape index: {}]
  %s1 = inlined_call_operand.hbm [shape: s32[8,128], index: 1, kind: input, shape index: {}]
  %s2 = inlined_call_operand.hbm [shape: f32[1,256], index: 2, kind: input, shape index: {}]
  %s3 = inlined_call_operand.hbm [shape: f32[8,128], index: 3, kind: output, shape index: {}]
  %s4 = sld [smem:[#allocation0]]
  $region65: #{tpu_custom_call.1} parent=0
    _
  %s6 = ssub.s32 1, %s4
  %s7 = scalar_select 0, %s6, %s4
  $region1: #{tpu_custom_call.1} parent=0
    #allocation3 [shape = 'u8[4096]{0}', space=vmem, size = 0x1000, scoped, tag = 'input window, operand 0, single buffered']
    #allocation4 [shape = 's32[2]{0}', space=sflag, size = 0x8, scoped, tag = 'scoped memory for tpu_custom_call.1']
    #allocation5 [shape = 's32[2]{0}', space=sflag, size = 0x8, scoped, tag = 'scoped memory for tpu_custom_call.1']
    #allocation6 [shape = 'u8[4096]{0}', space=vmem, size = 0x1000, scoped, tag = 'input window, operand 1, single buffered']
    #allocation7 [shape = 's32[1]{0}', space=sflag, size = 0x4, scoped, tag = 'scoped memory for tpu_custom_call.1']
    #allocation8 [shape = 'u8[1024]{0}', space=vmem, size = 0x400, scoped, tag = 'input window, operand 2']
    #allocation9 [shape = 'u8[4096]{0}', space=vmem, size = 0x1000, scoped, tag = 'output window, operand 0, single buffered']
    %8 = vsyncpa [#allocation4], 0
    %9 = vsyncpa [#allocation7], 0
    %10 = vsyncpa [#allocation5], 0
    loop: start=0, step=1, limit=4
    $region2: #{tpu_custom_call.1} parent=1 // loop_pre_header
      _
    $region3: #{tpu_custom_call.1} parent=1 // loop_header
      %s12 = sphi 0, %s16
      %p13 = scmp.ge.s32.totalorder %s12, 4
      %s19 = sphi 0, %s31
      %s20 = sphi 0, %s27
      %s21 = sphi 0, %s19
      %s22 = sphi 0, %s20
      %s23 = sphi 0, %s21
      %s24 = sphi 0, %s22
      %s34 = sphi 0, %s36
      %s37 = sphi 0, %s34
      %s38 = sphi 0, %s37
      %s54 = sphi 0, %s38
      %s60 = sphi 0, %s62
      %s63 = sphi 0, %s60
      %s64 = sphi 0, %s63
      %s80 = sphi 0, %s64
      %s86 = sphi 0, %s88
      %s89 = sphi 0, %s86
      %s90 = sphi 0, %s89
      %s106 = sphi 0, %s90
      %s112 = sphi 0, %s114
      %s115 = sphi 0, %s112
      %s116 = sphi 0, %s115
      %s132 = sphi 0, %s116
    $region4: #{tpu_custom_call.1} parent=1 // loop_header_branch
      %15 = sbr.rel (%p13) target = $region8
    $region5: #{tpu_custom_call.1} parent=1 // loop_body
      %s17 = ssub.s32 %s12, 1
      %s18 = ssub.s32 %s12, 2
      %s25 = sadd.s32 1, %s20
      %p26 = scmp.ge.s32.totalorder %s25, 2
      %s27 = scalar_select %p26, 0, %s25
      %s28 = sadd.s32 1, %s19
      %s29 = scalar_select %p26, %s28, %s19
      %p30 = scmp.ge.s32.totalorder %s29, 1
      %s31 = scalar_select %p30, 0, %s29
      %s32 = ssub.s32 %s19, %s31
      %p33 = scmp.eq.s32.totalorder %s32, 0
      %s35 = sadd.s32 %s34, 1
      %s36 = scalar_select %p33, %s34, %s35
      %p39 = pneg %p33
      %p40 = scmp.eq.s32.totalorder %s12, 1
      %p41 = por %p39, %p40
      %p42 = scmp.ne.s32.totalorder %s34, %s37
      %p43 = scmp.eq.s32.totalorder %s12, 0
      %p44 = por %p42, %p43
      %p45 = scmp.ne.s32.totalorder %s34, %s37
      %p46 = scmp.eq.s32.totalorder %s17, 1
      %p47 = por %p45, %p46
      %p48 = scmp.ne.s32.totalorder %s37, %s38
      %p49 = scmp.eq.s32.totalorder %s17, 0
      %p50 = por %p48, %p49
      %p51 = scmp.ne.s32.totalorder %s37, %s38
      %p52 = scmp.eq.s32.totalorder %s18, 1
      %p53 = por %p51, %p52
      %p55 = scmp.ne.s32.totalorder %s38, %s54
      %p56 = scmp.eq.s32.totalorder %s18, 0
      %p57 = por %p55, %p56
      %s58 = ssub.s32 %s19, %s31
      %p59 = scmp.eq.s32.totalorder %s58, 0
      %s61 = sadd.s32 %s60, 1
      %s62 = scalar_select %p59, %s60, %s61
      %p65 = pneg %p59
      %p66 = scmp.eq.s32.totalorder %s12, 1
      %p67 = por %p65, %p66
      %p68 = scmp.ne.s32.totalorder %s60, %s63
      %p69 = scmp.eq.s32.totalorder %s12, 0
      %p70 = por %p68, %p69
      %p71 = scmp.ne.s32.totalorder %s60, %s63
      %p72 = scmp.eq.s32.totalorder %s17, 1
      %p73 = por %p71, %p72
      %p74 = scmp.ne.s32.totalorder %s63, %s64
      %p75 = scmp.eq.s32.totalorder %s17, 0
      %p76 = por %p74, %p75
      %p77 = scmp.ne.s32.totalorder %s63, %s64
      %p78 = scmp.eq.s32.totalorder %s18, 1
      %p79 = por %p77, %p78
      %p81 = scmp.ne.s32.totalorder %s64, %s80
      %p82 = scmp.eq.s32.totalorder %s18, 0
      %p83 = por %p81, %p82
      %s84 = ssub.s32 %s20, %s27
      %p85 = scmp.eq.s32.totalorder %s84, 0
      %s87 = sadd.s32 %s86, 1
      %s88 = scalar_select %p85, %s86, %s87
      %p91 = pneg %p85
      %p92 = scmp.eq.s32.totalorder %s12, 1
      %p93 = por %p91, %p92
      %p94 = scmp.ne.s32.totalorder %s86, %s89
      %p95 = scmp.eq.s32.totalorder %s12, 0
      %p96 = por %p94, %p95
      %p97 = scmp.ne.s32.totalorder %s86, %s89
      %p98 = scmp.eq.s32.totalorder %s17, 1
      %p99 = por %p97, %p98
      %p100 = scmp.ne.s32.totalorder %s89, %s90
      %p101 = scmp.eq.s32.totalorder %s17, 0
      %p102 = por %p100, %p101
      %p103 = scmp.ne.s32.totalorder %s89, %s90
      %p104 = scmp.eq.s32.totalorder %s18, 1
      %p105 = por %p103, %p104
      %p107 = scmp.ne.s32.totalorder %s90, %s106
      %p108 = scmp.eq.s32.totalorder %s18, 0
      %p109 = por %p107, %p108
      %s110 = ssub.s32 %s19, %s31
      %p111 = scmp.eq.s32.totalorder %s110, 0
      %s113 = sadd.s32 %s112, 1
      %s114 = scalar_select %p111, %s112, %s113
      %p117 = pneg %p111
      %p118 = scmp.eq.s32.totalorder %s12, 1
      %p119 = por %p117, %p118
      %p120 = scmp.ne.s32.totalorder %s112, %s115
      %p121 = scmp.eq.s32.totalorder %s12, 0
      %p122 = por %p120, %p121
      %p123 = scmp.ne.s32.totalorder %s112, %s115
      %p124 = scmp.eq.s32.totalorder %s17, 1
      %p125 = por %p123, %p124
      %p126 = scmp.ne.s32.totalorder %s115, %s116
      %p127 = scmp.eq.s32.totalorder %s17, 0
      %p128 = por %p126, %p127
      %p129 = scmp.ne.s32.totalorder %s115, %s116
      %p130 = scmp.eq.s32.totalorder %s18, 1
      %p131 = por %p129, %p130
      %p133 = scmp.ne.s32.totalorder %s116, %s132
      %p134 = scmp.eq.s32.totalorder %s18, 0
      %p135 = por %p133, %p134
      %p136 = scmp.le.s32.totalorder 1, %s12
      %p137 = scmp.lt.s32.totalorder %s12, 3
      %p138 = pnand %p136, %p137
      %p139 = pneg %p138
      // Predicated region
      $region9: #{tpu_custom_call.1} parent=5 // pred_check
        _
      $region10: #{tpu_custom_call.1} parent=5 // pred_check_branch
        %141 = sbr.rel (%p138) target = $region12
      $region11: #{tpu_custom_call.1} parent=5 // pred_region
        %s142 = ssub.s32 %s12, 1
        // Predicated region
        $region13: #{tpu_custom_call.1} parent=11 // pred_check
          %p143 = pneg %p50
        $region14: #{tpu_custom_call.1} parent=11 // pred_check_branch
          %145 = sbr.rel (%p143) target = $region16
        $region15: #{tpu_custom_call.1} parent=11 // pred_region
          %147 = vsyncadd [#allocation4], 0
          %s148 = smul.addr %s21, 8
          %s149 = scalar_lea.hbm %s0, %s148
          %s151 = sshll.u32 %s149, 4
          %s152 = int_to_ptr.hbm [resolvable:$true] %s151
          %s153 = sshll.u32 [#allocation3], 4
          %s154 = int_to_ptr.vmem [resolvable:$true] %s153
          %156 = dma.hbm_to_vmem [thread:$0]  %s152, 128, %s154, [#allocation4]
        $region16: #{tpu_custom_call.1} parent=11 // pred_fallthru
          _
        // Predicated region
        $region17: #{tpu_custom_call.1} parent=11 // pred_check
          %p157 = pneg %p76
        $region18: #{tpu_custom_call.1} parent=11 // pred_check_branch
          %159 = sbr.rel (%p157) target = $region20
        $region19: #{tpu_custom_call.1} parent=11 // pred_region
          %161 = vsyncadd [#allocation7], 0
          %s162 = smul.addr %s21, 8
          %s163 = scalar_lea.hbm %s1, %s162
          %s165 = sshll.u32 %s163, 4
          %s166 = int_to_ptr.hbm [resolvable:$true] %s165
          %s167 = sshll.u32 [#allocation6], 4
          %s168 = int_to_ptr.vmem [resolvable:$true] %s167
          %170 = dma.hbm_to_vmem [thread:$0]  %s166, 128, %s168, [#allocation7]
        $region20: #{tpu_custom_call.1} parent=11 // pred_fallthru
          _
      $region12: #{tpu_custom_call.1} parent=5 // pred_fallthru
        _
      %p171 = scmp.lt.s32.totalorder %s12, 2
      // Predicated region
      $region21: #{tpu_custom_call.1} parent=5 // pred_check
        %p172 = pneg %p171
      $region22: #{tpu_custom_call.1} parent=5 // pred_check_branch
        %174 = sbr.rel (%p172) target = $region24
      $region23: #{tpu_custom_call.1} parent=5 // pred_region
        // Predicated region
        $region25: #{tpu_custom_call.1} parent=23 // pred_check
          %p175 = pneg %p96
        $region26: #{tpu_custom_call.1} parent=23 // pred_check_branch
          %177 = sbr.rel (%p175) target = $region28
        $region27: #{tpu_custom_call.1} parent=23 // pred_region
          %s178 = sand.u32 %s12, 1
          %s179 = scalar_lea.sflag [#allocation4], %s178
          %s180 = sand.u32 %s86, 1
          %s181 = scalar_lea.vmem [#allocation8], %s180
          %183 = vsyncadd %s179, 0
          %s184 = scalar_lea.hbm %s2, %s20
          %s186 = sshll.u32 %s184, 4
          %s187 = int_to_ptr.hbm [resolvable:$true] %s186
          %s188 = sshll.u32 %s181, 4
          %s189 = int_to_ptr.vmem [resolvable:$true] %s188
          %191 = dma.hbm_to_vmem [thread:$0]  %s187, 16, %s189, %s179
        $region28: #{tpu_custom_call.1} parent=23 // pred_fallthru
          _
      $region24: #{tpu_custom_call.1} parent=5 // pred_fallthru
        _
      %p192 = scmp.le.s32.totalorder 1, %s12
      %p193 = scmp.lt.s32.totalorder %s12, 3
      %p194 = pnand %p192, %p193
      %p195 = pneg %p194
      // Predicated region
      $region29: #{tpu_custom_call.1} parent=5 // pred_check
        _
      $region30: #{tpu_custom_call.1} parent=5 // pred_check_branch
        %197 = sbr.rel (%p194) target = $region32
      $region31: #{tpu_custom_call.1} parent=5 // pred_region
        %s198 = ssub.s32 %s12, 1
        // Predicated region
        $region33: #{tpu_custom_call.1} parent=31 // pred_check
          %p199 = pneg %p50
        $region34: #{tpu_custom_call.1} parent=31 // pred_check_branch
          %201 = sbr.rel (%p199) target = $region36
        $region35: #{tpu_custom_call.1} parent=31 // pred_region
          %203 = dma.done [#allocation4], 128
        $region36: #{tpu_custom_call.1} parent=31 // pred_fallthru
          _
        // Predicated region
        $region37: #{tpu_custom_call.1} parent=31 // pred_check
          %p204 = pneg %p76
        $region38: #{tpu_custom_call.1} parent=31 // pred_check_branch
          %206 = sbr.rel (%p204) target = $region40
        $region39: #{tpu_custom_call.1} parent=31 // pred_region
          %208 = dma.done [#allocation7], 128
        $region40: #{tpu_custom_call.1} parent=31 // pred_fallthru
          _
        %s209 = sand.u32 %s17, 1
        %s210 = scalar_lea.sflag [#allocation4], %s209
        %s211 = sand.u32 %s89, 1
        %s212 = scalar_lea.vmem [#allocation8], %s211
        // Predicated region
        $region41: #{tpu_custom_call.1} parent=31 // pred_check
          %p213 = pneg %p102
        $region42: #{tpu_custom_call.1} parent=31 // pred_check_branch
          %215 = sbr.rel (%p213) target = $region44
        $region43: #{tpu_custom_call.1} parent=31 // pred_region
          %217 = dma.done %s210, 16
        $region44: #{tpu_custom_call.1} parent=31 // pred_fallthru
          _
        %p218 = pneg %p50
        %p219 = pneg %p47
        %p220 = pneg %p76
        %p221 = pneg %p73
        %s222 = sand.u32 %s17, 1
        %s223 = scalar_lea.sflag [#allocation4], %s222
        %s224 = sand.u32 %s89, 1
        %s225 = scalar_lea.vmem [#allocation8], %s224
        %p226 = pneg %p102
        %p227 = pneg %p99
        %p228 = pneg %p128
        %p229 = pneg %p125
        %p230 = scmp.eq.s32.totalorder %s22, 0
        // Predicated region
        $region45: #{tpu_custom_call.1} parent=31 // pred_check
          %p231 = pneg %p230
        $region46: #{tpu_custom_call.1} parent=31 // pred_check_branch
          %233 = sbr.rel (%p231) target = $region48
        $region47: #{tpu_custom_call.1} parent=31 // pred_region
          %234 = vst [vmem:[#allocation2] sm:$0xff] 0.0
        $region48: #{tpu_custom_call.1} parent=31 // pred_fallthru
          _
        %v235 = vld [vmem:[%s212] sm:$0x1]
        %v236 = vlaneseq
        %v237 = vshrl.u32 %v236, 7
        %v238 = vadd.s32 %v237, 8
        %v239 = vadd.s32 %v237, 16
        %v240 = vadd.s32 %v237, 24
        %v241 = vadd.s32 %v237, 32
        %v242 = vadd.s32 %v237, 40
        %v243 = vadd.s32 %v237, 48
        %v244 = vadd.s32 %v237, 56
        %v245 = vadd.s32 %v237, 64
        %v246 = vadd.s32 %v237, 72
        %v247 = vadd.s32 %v237, 80
        %v248 = vadd.s32 %v237, 88
        %v249 = vadd.s32 %v237, 96
        %v250 = vadd.s32 %v237, 104
        %v251 = vadd.s32 %v237, 112
        %v252 = vadd.s32 %v237, 120
        %s253 = smul.u32 %s22, 128
        %v254 = vstv %s253
        %v255 = vadd.s32 %v237, %v254
        %v256 = vadd.s32 %v238, %v254
        %v257 = vadd.s32 %v239, %v254
        %v258 = vadd.s32 %v240, %v254
        %v259 = vadd.s32 %v241, %v254
        %v260 = vadd.s32 %v242, %v254
        %v261 = vadd.s32 %v243, %v254
        %v262 = vadd.s32 %v244, %v254
        %v263 = vadd.s32 %v245, %v254
        %v264 = vadd.s32 %v246, %v254
        %v265 = vadd.s32 %v247, %v254
        %v266 = vadd.s32 %v248, %v254
        %v267 = vadd.s32 %v249, %v254
        %v268 = vadd.s32 %v250, %v254
        %v269 = vadd.s32 %v251, %v254
        %v270 = vadd.s32 %v252, %v254
        %v271 = vld [vmem:[#allocation3] sm:$0x1]
        %v272 = vld [vmem:[#allocation6] sm:$0x1]
        %v273 = vperm.slane %v271, 0
        %vm274 = vcmp.eq.s32.totalorder %v255, %v273
        %vm275 = vcmp.eq.s32.totalorder %v256, %v273
        %vm276 = vcmp.eq.s32.totalorder %v257, %v273
        %vm277 = vcmp.eq.s32.totalorder %v258, %v273
        %vm278 = vcmp.eq.s32.totalorder %v259, %v273
        %vm279 = vcmp.eq.s32.totalorder %v260, %v273
        %vm280 = vcmp.eq.s32.totalorder %v261, %v273
        %vm281 = vcmp.eq.s32.totalorder %v262, %v273
        %vm282 = vcmp.eq.s32.totalorder %v263, %v273
        %vm283 = vcmp.eq.s32.totalorder %v264, %v273
        %vm284 = vcmp.eq.s32.totalorder %v265, %v273
        %vm285 = vcmp.eq.s32.totalorder %v266, %v273
        %vm286 = vcmp.eq.s32.totalorder %v267, %v273
        %vm287 = vcmp.eq.s32.totalorder %v268, %v273
        %vm288 = vcmp.eq.s32.totalorder %v269, %v273
        %vm289 = vcmp.eq.s32.totalorder %v270, %v273
        %v290 = vperm.slane %v272, 0
        %vm291 = vcmp.eq.s32.totalorder %v255, %v290
        %vm292 = vcmp.eq.s32.totalorder %v256, %v290
        %vm293 = vcmp.eq.s32.totalorder %v257, %v290
        %vm294 = vcmp.eq.s32.totalorder %v258, %v290
        %vm295 = vcmp.eq.s32.totalorder %v259, %v290
        %vm296 = vcmp.eq.s32.totalorder %v260, %v290
        %vm297 = vcmp.eq.s32.totalorder %v261, %v290
        %vm298 = vcmp.eq.s32.totalorder %v262, %v290
        %vm299 = vcmp.eq.s32.totalorder %v263, %v290
        %vm300 = vcmp.eq.s32.totalorder %v264, %v290
        %vm301 = vcmp.eq.s32.totalorder %v265, %v290
        %vm302 = vcmp.eq.s32.totalorder %v266, %v290
        %vm303 = vcmp.eq.s32.totalorder %v267, %v290
        %vm304 = vcmp.eq.s32.totalorder %v268, %v290
        %vm305 = vcmp.eq.s32.totalorder %v269, %v290
        %vm306 = vcmp.eq.s32.totalorder %v270, %v290
        %vm307 = vmor %vm274, %vm291
        %vm308 = vmor %vm275, %vm292
        %vm309 = vmor %vm276, %vm293
        %vm310 = vmor %vm277, %vm294
        %vm311 = vmor %vm278, %vm295
        %vm312 = vmor %vm279, %vm296
        %vm313 = vmor %vm280, %vm297
        %vm314 = vmor %vm281, %vm298
        %vm315 = vmor %vm282, %vm299
        %vm316 = vmor %vm283, %vm300
        %vm317 = vmor %vm284, %vm301
        %vm318 = vmor %vm285, %vm302
        %vm319 = vmor %vm286, %vm303
        %vm320 = vmor %vm287, %vm304
        %vm321 = vmor %vm288, %vm305
        %vm322 = vmor %vm289, %vm306
        %v323 = vsel %vm307, 1, 0
        %v324 = vsel %vm308, 1, 0
        %v325 = vsel %vm309, 1, 0
        %v326 = vsel %vm310, 1, 0
        %v327 = vsel %vm311, 1, 0
        %v328 = vsel %vm312, 1, 0
        %v329 = vsel %vm313, 1, 0
        %v330 = vsel %vm314, 1, 0
        %v331 = vsel %vm315, 1, 0
        %v332 = vsel %vm316, 1, 0
        %v333 = vsel %vm317, 1, 0
        %v334 = vsel %vm318, 1, 0
        %v335 = vsel %vm319, 1, 0
        %v336 = vsel %vm320, 1, 0
        %v337 = vsel %vm321, 1, 0
        %v338 = vsel %vm322, 1, 0
        %v339 = vcvt.s32.f32 %v323
        %v340 = vcvt.s32.f32 %v324
        %v341 = vcvt.s32.f32 %v325
        %v342 = vcvt.s32.f32 %v326
        %v343 = vcvt.s32.f32 %v327
        %v344 = vcvt.s32.f32 %v328
        %v345 = vcvt.s32.f32 %v329
        %v346 = vcvt.s32.f32 %v330
        %v347 = vcvt.s32.f32 %v331
        %v348 = vcvt.s32.f32 %v332
        %v349 = vcvt.s32.f32 %v333
        %v350 = vcvt.s32.f32 %v334
        %v351 = vcvt.s32.f32 %v335
        %v352 = vcvt.s32.f32 %v336
        %v353 = vcvt.s32.f32 %v337
        %v354 = vcvt.s32.f32 %v338
        %v355 = vld [vmem:[#allocation2] sm:$0x1]
        %356 = vmatpush.msra.mxu0 %v354
        %357 = vmatpush.msra.mxu0 %v353
        %358 = vmatpush.msra.mxu0 %v352
        %359 = vmatpush.msra.mxu0 %v351
        %360 = vmatpush.msra.mxu0 %v350
        %361 = vmatpush.msra.mxu0 %v349
        %362 = vmatpush.msra.mxu0 %v348
        %363 = vmatpush.msra.mxu0 %v347
        %364 = vmatpush.msra.mxu0 %v346
        %365 = vmatpush.msra.mxu0 %v345
        %366 = vmatpush.msra.mxu0 %v344
        %367 = vmatpush.msra.mxu0 %v343
        %368 = vmatpush.msra.mxu0 %v342
        %369 = vmatpush.msra.mxu0 %v341
        %370 = vmatpush.msra.mxu0 %v340
        %371 = vmatpush.msra.mxu0 %v339
        %372 = vmatmul.f32.gmra.mxu0 %v235
        %v373 = vpop.f32.mrf.mxu0
        %v374 = vadd.f32 0.0, %v373
        %375 = vdwg.mxu0
        %v376 = vadd.f32 %v355, %v374
        %377 = vst [vmem:[#allocation2] sm:$0x1] %v376
        %v378 = vld [vmem:[#allocation3 + $0x1] sm:$0x1]
        %v379 = vld [vmem:[#allocation6 + $0x1] sm:$0x1]
        %v380 = vperm.slane %v378, 0
        %vm381 = vcmp.eq.s32.totalorder %v255, %v380
        %vm382 = vcmp.eq.s32.totalorder %v256, %v380
        %vm383 = vcmp.eq.s32.totalorder %v257, %v380
        %vm384 = vcmp.eq.s32.totalorder %v258, %v380
        %vm385 = vcmp.eq.s32.totalorder %v259, %v380
        %vm386 = vcmp.eq.s32.totalorder %v260, %v380
        %vm387 = vcmp.eq.s32.totalorder %v261, %v380
        %vm388 = vcmp.eq.s32.totalorder %v262, %v380
        %vm389 = vcmp.eq.s32.totalorder %v263, %v380
        %vm390 = vcmp.eq.s32.totalorder %v264, %v380
        %vm391 = vcmp.eq.s32.totalorder %v265, %v380
        %vm392 = vcmp.eq.s32.totalorder %v266, %v380
        %vm393 = vcmp.eq.s32.totalorder %v267, %v380
        %vm394 = vcmp.eq.s32.totalorder %v268, %v380
        %vm395 = vcmp.eq.s32.totalorder %v269, %v380
        %vm396 = vcmp.eq.s32.totalorder %v270, %v380
        %v397 = vperm.slane %v379, 0
        %vm398 = vcmp.eq.s32.totalorder %v255, %v397
        %vm399 = vcmp.eq.s32.totalorder %v256, %v397
        %vm400 = vcmp.eq.s32.totalorder %v257, %v397
        %vm401 = vcmp.eq.s32.totalorder %v258, %v397
        %vm402 = vcmp.eq.s32.totalorder %v259, %v397
        %vm403 = vcmp.eq.s32.totalorder %v260, %v397
        %vm404 = vcmp.eq.s32.totalorder %v261, %v397
        %vm405 = vcmp.eq.s32.totalorder %v262, %v397
        %vm406 = vcmp.eq.s32.totalorder %v263, %v397
        %vm407 = vcmp.eq.s32.totalorder %v264, %v397
        %vm408 = vcmp.eq.s32.totalorder %v265, %v397
        %vm409 = vcmp.eq.s32.totalorder %v266, %v397
        %vm410 = vcmp.eq.s32.totalorder %v267, %v397
        %vm411 = vcmp.eq.s32.totalorder %v268, %v397
        %vm412 = vcmp.eq.s32.totalorder %v269, %v397
        %vm413 = vcmp.eq.s32.totalorder %v270, %v397
        %vm414 = vmor %vm381, %vm398
        %vm415 = vmor %vm382, %vm399
        %vm416 = vmor %vm383, %vm400
        %vm417 = vmor %vm384, %vm401
        %vm418 = vmor %vm385, %vm402
        %vm419 = vmor %vm386, %vm403
        %vm420 = vmor %vm387, %vm404
        %vm421 = vmor %vm388, %vm405
        %vm422 = vmor %vm389, %vm406
        %vm423 = vmor %vm390, %vm407
        %vm424 = vmor %vm391, %vm408
        %vm425 = vmor %vm392, %vm409
        %vm426 = vmor %vm393, %vm410
        %vm427 = vmor %vm394, %vm411
        %vm428 = vmor %vm395, %vm412
        %vm429 = vmor %vm396, %vm413
        %v430 = vsel %vm414, 1, 0
        %v431 = vsel %vm415, 1, 0
        %v432 = vsel %vm416, 1, 0
        %v433 = vsel %vm417, 1, 0
        %v434 = vsel %vm418, 1, 0
        %v435 = vsel %vm419, 1, 0
        %v436 = vsel %vm420, 1, 0
        %v437 = vsel %vm421, 1, 0
        %v438 = vsel %vm422, 1, 0
        %v439 = vsel %vm423, 1, 0
        %v440 = vsel %vm424, 1, 0
        %v441 = vsel %vm425, 1, 0
        %v442 = vsel %vm426, 1, 0
        %v443 = vsel %vm427, 1, 0
        %v444 = vsel %vm428, 1, 0
        %v445 = vsel %vm429, 1, 0
        %v446 = vcvt.s32.f32 %v430
        %v447 = vcvt.s32.f32 %v431
        %v448 = vcvt.s32.f32 %v432
        %v449 = vcvt.s32.f32 %v433
        %v450 = vcvt.s32.f32 %v434
        %v451 = vcvt.s32.f32 %v435
        %v452 = vcvt.s32.f32 %v436
        %v453 = vcvt.s32.f32 %v437
        %v454 = vcvt.s32.f32 %v438
        %v455 = vcvt.s32.f32 %v439
        %v456 = vcvt.s32.f32 %v440
        %v457 = vcvt.s32.f32 %v441
        %v458 = vcvt.s32.f32 %v442
        %v459 = vcvt.s32.f32 %v443
        %v460 = vcvt.s32.f32 %v444
        %v461 = vcvt.s32.f32 %v445
        %v462 = vld [vmem:[#allocation2 + $0x1] sm:$0x1]
        %463 = vmatpush.msra.mxu0 %v461
        %464 = vmatpush.msra.mxu0 %v460
        %465 = vmatpush.msra.mxu0 %v459
        %466 = vmatpush.msra.mxu0 %v458
        %467 = vmatpush.msra.mxu0 %v457
        %468 = vmatpush.msra.mxu0 %v456
        %469 = vmatpush.msra.mxu0 %v455
        %470 = vmatpush.msra.mxu0 %v454
        %471 = vmatpush.msra.mxu0 %v453
        %472 = vmatpush.msra.mxu0 %v452
        %473 = vmatpush.msra.mxu0 %v451
        %474 = vmatpush.msra.mxu0 %v450
        %475 = vmatpush.msra.mxu0 %v449
        %476 = vmatpush.msra.mxu0 %v448
        %477 = vmatpush.msra.mxu0 %v447
        %478 = vmatpush.msra.mxu0 %v446
        %479 = vmatmul.f32.gmra.mxu0 %v235
        %v480 = vpop.f32.mrf.mxu0
        %v481 = vadd.f32 0.0, %v480
        %482 = vdwg.mxu0
        %v483 = vadd.f32 %v462, %v481
        %484 = vst [vmem:[#allocation2 + $0x1] sm:$0x1] %v483
        %v485 = vld [vmem:[#allocation3 + $0x2] sm:$0x1]
        %v486 = vld [vmem:[#allocation6 + $0x2] sm:$0x1]
        %v487 = vperm.slane %v485, 0
        %vm488 = vcmp.eq.s32.totalorder %v255, %v487
        %vm489 = vcmp.eq.s32.totalorder %v256, %v487
        %vm490 = vcmp.eq.s32.totalorder %v257, %v487
        %vm491 = vcmp.eq.s32.totalorder %v258, %v487
        %vm492 = vcmp.eq.s32.totalorder %v259, %v487
        %vm493 = vcmp.eq.s32.totalorder %v260, %v487
        %vm494 = vcmp.eq.s32.totalorder %v261, %v487
        %vm495 = vcmp.eq.s32.totalorder %v262, %v487
        %vm496 = vcmp.eq.s32.totalorder %v263, %v487
        %vm497 = vcmp.eq.s32.totalorder %v264, %v487
        %vm498 = vcmp.eq.s32.totalorder %v265, %v487
        %vm499 = vcmp.eq.s32.totalorder %v266, %v487
        %vm500 = vcmp.eq.s32.totalorder %v267, %v487
        %vm501 = vcmp.eq.s32.totalorder %v268, %v487
        %vm502 = vcmp.eq.s32.totalorder %v269, %v487
        %vm503 = vcmp.eq.s32.totalorder %v270, %v487
        %v504 = vperm.slane %v486, 0
        %vm505 = vcmp.eq.s32.totalorder %v255, %v504
        %vm506 = vcmp.eq.s32.totalorder %v256, %v504
        %vm507 = vcmp.eq.s32.totalorder %v257, %v504
        %vm508 = vcmp.eq.s32.totalorder %v258, %v504
        %vm509 = vcmp.eq.s32.totalorder %v259, %v504
        %vm510 = vcmp.eq.s32.totalorder %v260, %v504
        %vm511 = vcmp.eq.s32.totalorder %v261, %v504
        %vm512 = vcmp.eq.s32.totalorder %v262, %v504
        %vm513 = vcmp.eq.s32.totalorder %v263, %v504
        %vm514 = vcmp.eq.s32.totalorder %v264, %v504
        %vm515 = vcmp.eq.s32.totalorder %v265, %v504
        %vm516 = vcmp.eq.s32.totalorder %v266, %v504
        %vm517 = vcmp.eq.s32.totalorder %v267, %v504
        %vm518 = vcmp.eq.s32.totalorder %v268, %v504
        %vm519 = vcmp.eq.s32.totalorder %v269, %v504
        %vm520 = vcmp.eq.s32.totalorder %v270, %v504
        %vm521 = vmor %vm488, %vm505
        %vm522 = vmor %vm489, %vm506
        %vm523 = vmor %vm490, %vm507
        %vm524 = vmor %vm491, %vm508
        %vm525 = vmor %vm492, %vm509
        %vm526 = vmor %vm493, %vm510
        %vm527 = vmor %vm494, %vm511
        %vm528 = vmor %vm495, %vm512
        %vm529 = vmor %vm496, %vm513
        %vm530 = vmor %vm497, %vm514
        %vm531 = vmor %vm498, %vm515
        %vm532 = vmor %vm499, %vm516
        %vm533 = vmor %vm500, %vm517
        %vm534 = vmor %vm501, %vm518
        %vm535 = vmor %vm502, %vm519
        %vm536 = vmor %vm503, %vm520
        %v537 = vsel %vm521, 1, 0
        %v538 = vsel %vm522, 1, 0
        %v539 = vsel %vm523, 1, 0
        %v540 = vsel %vm524, 1, 0
        %v541 = vsel %vm525, 1, 0
        %v542 = vsel %vm526, 1, 0
        %v543 = vsel %vm527, 1, 0
        %v544 = vsel %vm528, 1, 0
        %v545 = vsel %vm529, 1, 0
        %v546 = vsel %vm530, 1, 0
        %v547 = vsel %vm531, 1, 0
        %v548 = vsel %vm532, 1, 0
        %v549 = vsel %vm533, 1, 0
        %v550 = vsel %vm534, 1, 0
        %v551 = vsel %vm535, 1, 0
        %v552 = vsel %vm536, 1, 0
        %v553 = vcvt.s32.f32 %v537
        %v554 = vcvt.s32.f32 %v538
        %v555 = vcvt.s32.f32 %v539
        %v556 = vcvt.s32.f32 %v540
        %v557 = vcvt.s32.f32 %v541
        %v558 = vcvt.s32.f32 %v542
        %v559 = vcvt.s32.f32 %v543
        %v560 = vcvt.s32.f32 %v544
        %v561 = vcvt.s32.f32 %v545
        %v562 = vcvt.s32.f32 %v546
        %v563 = vcvt.s32.f32 %v547
        %v564 = vcvt.s32.f32 %v548
        %v565 = vcvt.s32.f32 %v549
        %v566 = vcvt.s32.f32 %v550
        %v567 = vcvt.s32.f32 %v551
        %v568 = vcvt.s32.f32 %v552
        %v569 = vld [vmem:[#allocation2 + $0x2] sm:$0x1]
        %570 = vmatpush.msra.mxu0 %v568
        %571 = vmatpush.msra.mxu0 %v567
        %572 = vmatpush.msra.mxu0 %v566
        %573 = vmatpush.msra.mxu0 %v565
        %574 = vmatpush.msra.mxu0 %v564
        %575 = vmatpush.msra.mxu0 %v563
        %576 = vmatpush.msra.mxu0 %v562
        %577 = vmatpush.msra.mxu0 %v561
        %578 = vmatpush.msra.mxu0 %v560
        %579 = vmatpush.msra.mxu0 %v559
        %580 = vmatpush.msra.mxu0 %v558
        %581 = vmatpush.msra.mxu0 %v557
        %582 = vmatpush.msra.mxu0 %v556
        %583 = vmatpush.msra.mxu0 %v555
        %584 = vmatpush.msra.mxu0 %v554
        %585 = vmatpush.msra.mxu0 %v553
        %586 = vmatmul.f32.gmra.mxu0 %v235
        %v587 = vpop.f32.mrf.mxu0
        %v588 = vadd.f32 0.0, %v587
        %589 = vdwg.mxu0
        %v590 = vadd.f32 %v569, %v588
        %591 = vst [vmem:[#allocation2 + $0x2] sm:$0x1] %v590
        %v592 = vld [vmem:[#allocation3 + $0x3] sm:$0x1]
        %v593 = vld [vmem:[#allocation6 + $0x3] sm:$0x1]
        %v594 = vperm.slane %v592, 0
        %vm595 = vcmp.eq.s32.totalorder %v255, %v594
        %vm596 = vcmp.eq.s32.totalorder %v256, %v594
        %vm597 = vcmp.eq.s32.totalorder %v257, %v594
        %vm598 = vcmp.eq.s32.totalorder %v258, %v594
        %vm599 = vcmp.eq.s32.totalorder %v259, %v594
        %vm600 = vcmp.eq.s32.totalorder %v260, %v594
        %vm601 = vcmp.eq.s32.totalorder %v261, %v594
        %vm602 = vcmp.eq.s32.totalorder %v262, %v594
        %vm603 = vcmp.eq.s32.totalorder %v263, %v594
        %vm604 = vcmp.eq.s32.totalorder %v264, %v594
        %vm605 = vcmp.eq.s32.totalorder %v265, %v594
        %vm606 = vcmp.eq.s32.totalorder %v266, %v594
        %vm607 = vcmp.eq.s32.totalorder %v267, %v594
        %vm608 = vcmp.eq.s32.totalorder %v268, %v594
        %vm609 = vcmp.eq.s32.totalorder %v269, %v594
        %vm610 = vcmp.eq.s32.totalorder %v270, %v594
        %v611 = vperm.slane %v593, 0
        %vm612 = vcmp.eq.s32.totalorder %v255, %v611
        %vm613 = vcmp.eq.s32.totalorder %v256, %v611
        %vm614 = vcmp.eq.s32.totalorder %v257, %v611
        %vm615 = vcmp.eq.s32.totalorder %v258, %v611
        %vm616 = vcmp.eq.s32.totalorder %v259, %v611
        %vm617 = vcmp.eq.s32.totalorder %v260, %v611
        %vm618 = vcmp.eq.s32.totalorder %v261, %v611
        %vm619 = vcmp.eq.s32.totalorder %v262, %v611
        %vm620 = vcmp.eq.s32.totalorder %v263, %v611
        %vm621 = vcmp.eq.s32.totalorder %v264, %v611
        %vm622 = vcmp.eq.s32.totalorder %v265, %v611
        %vm623 = vcmp.eq.s32.totalorder %v266, %v611
        %vm624 = vcmp.eq.s32.totalorder %v267, %v611
        %vm625 = vcmp.eq.s32.totalorder %v268, %v611
        %vm626 = vcmp.eq.s32.totalorder %v269, %v611
        %vm627 = vcmp.eq.s32.totalorder %v270, %v611
        %vm628 = vmor %vm595, %vm612
        %vm629 = vmor %vm596, %vm613
        %vm630 = vmor %vm597, %vm614
        %vm631 = vmor %vm598, %vm615
        %vm632 = vmor %vm599, %vm616
        %vm633 = vmor %vm600, %vm617
        %vm634 = vmor %vm601, %vm618
        %vm635 = vmor %vm602, %vm619
        %vm636 = vmor %vm603, %vm620
        %vm637 = vmor %vm604, %vm621
        %vm638 = vmor %vm605, %vm622
        %vm639 = vmor %vm606, %vm623
        %vm640 = vmor %vm607, %vm624
        %vm641 = vmor %vm608, %vm625
        %vm642 = vmor %vm609, %vm626
        %vm643 = vmor %vm610, %vm627
        %v644 = vsel %vm628, 1, 0
        %v645 = vsel %vm629, 1, 0
        %v646 = vsel %vm630, 1, 0
        %v647 = vsel %vm631, 1, 0
        %v648 = vsel %vm632, 1, 0
        %v649 = vsel %vm633, 1, 0
        %v650 = vsel %vm634, 1, 0
        %v651 = vsel %vm635, 1, 0
        %v652 = vsel %vm636, 1, 0
        %v653 = vsel %vm637, 1, 0
        %v654 = vsel %vm638, 1, 0
        %v655 = vsel %vm639, 1, 0
        %v656 = vsel %vm640, 1, 0
        %v657 = vsel %vm641, 1, 0
        %v658 = vsel %vm642, 1, 0
        %v659 = vsel %vm643, 1, 0
        %v660 = vcvt.s32.f32 %v644
        %v661 = vcvt.s32.f32 %v645
        %v662 = vcvt.s32.f32 %v646
        %v663 = vcvt.s32.f32 %v647
        %v664 = vcvt.s32.f32 %v648
        %v665 = vcvt.s32.f32 %v649
        %v666 = vcvt.s32.f32 %v650
        %v667 = vcvt.s32.f32 %v651
        %v668 = vcvt.s32.f32 %v652
        %v669 = vcvt.s32.f32 %v653
        %v670 = vcvt.s32.f32 %v654
        %v671 = vcvt.s32.f32 %v655
        %v672 = vcvt.s32.f32 %v656
        %v673 = vcvt.s32.f32 %v657
        %v674 = vcvt.s32.f32 %v658
        %v675 = vcvt.s32.f32 %v659
        %v676 = vld [vmem:[#allocation2 + $0x3] sm:$0x1]
        %677 = vmatpush.msra.mxu0 %v675
        %678 = vmatpush.msra.mxu0 %v674
        %679 = vmatpush.msra.mxu0 %v673
        %680 = vmatpush.msra.mxu0 %v672
        %681 = vmatpush.msra.mxu0 %v671
        %682 = vmatpush.msra.mxu0 %v670
        %683 = vmatpush.msra.mxu0 %v669
        %684 = vmatpush.msra.mxu0 %v668
        %685 = vmatpush.msra.mxu0 %v667
        %686 = vmatpush.msra.mxu0 %v666
        %687 = vmatpush.msra.mxu0 %v665
        %688 = vmatpush.msra.mxu0 %v664
        %689 = vmatpush.msra.mxu0 %v663
        %690 = vmatpush.msra.mxu0 %v662
        %691 = vmatpush.msra.mxu0 %v661
        %692 = vmatpush.msra.mxu0 %v660
        %693 = vmatmul.f32.gmra.mxu0 %v235
        %v694 = vpop.f32.mrf.mxu0
        %v695 = vadd.f32 0.0, %v694
        %696 = vdwg.mxu0
        %v697 = vadd.f32 %v676, %v695
        %698 = vst [vmem:[#allocation2 + $0x3] sm:$0x1] %v697
        %v699 = vld [vmem:[#allocation3 + $0x4] sm:$0x1]
        %v700 = vld [vmem:[#allocation6 + $0x4] sm:$0x1]
        %v701 = vperm.slane %v699, 0
        %vm702 = vcmp.eq.s32.totalorder %v255, %v701
        %vm703 = vcmp.eq.s32.totalorder %v256, %v701
        %vm704 = vcmp.eq.s32.totalorder %v257, %v701
        %vm705 = vcmp.eq.s32.totalorder %v258, %v701
        %vm706 = vcmp.eq.s32.totalorder %v259, %v701
        %vm707 = vcmp.eq.s32.totalorder %v260, %v701
        %vm708 = vcmp.eq.s32.totalorder %v261, %v701
        %vm709 = vcmp.eq.s32.totalorder %v262, %v701
        %vm710 = vcmp.eq.s32.totalorder %v263, %v701
        %vm711 = vcmp.eq.s32.totalorder %v264, %v701
        %vm712 = vcmp.eq.s32.totalorder %v265, %v701
        %vm713 = vcmp.eq.s32.totalorder %v266, %v701
        %vm714 = vcmp.eq.s32.totalorder %v267, %v701
        %vm715 = vcmp.eq.s32.totalorder %v268, %v701
        %vm716 = vcmp.eq.s32.totalorder %v269, %v701
        %vm717 = vcmp.eq.s32.totalorder %v270, %v701
        %v718 = vperm.slane %v700, 0
        %vm719 = vcmp.eq.s32.totalorder %v255, %v718
        %vm720 = vcmp.eq.s32.totalorder %v256, %v718
        %vm721 = vcmp.eq.s32.totalorder %v257, %v718
        %vm722 = vcmp.eq.s32.totalorder %v258, %v718
        %vm723 = vcmp.eq.s32.totalorder %v259, %v718
        %vm724 = vcmp.eq.s32.totalorder %v260, %v718
        %vm725 = vcmp.eq.s32.totalorder %v261, %v718
        %vm726 = vcmp.eq.s32.totalorder %v262, %v718
        %vm727 = vcmp.eq.s32.totalorder %v263, %v718
        %vm728 = vcmp.eq.s32.totalorder %v264, %v718
        %vm729 = vcmp.eq.s32.totalorder %v265, %v718
        %vm730 = vcmp.eq.s32.totalorder %v266, %v718
        %vm731 = vcmp.eq.s32.totalorder %v267, %v718
        %vm732 = vcmp.eq.s32.totalorder %v268, %v718
        %vm733 = vcmp.eq.s32.totalorder %v269, %v718
        %vm734 = vcmp.eq.s32.totalorder %v270, %v718
        %vm735 = vmor %vm702, %vm719
        %vm736 = vmor %vm703, %vm720
        %vm737 = vmor %vm704, %vm721
        %vm738 = vmor %vm705, %vm722
        %vm739 = vmor %vm706, %vm723
        %vm740 = vmor %vm707, %vm724
        %vm741 = vmor %vm708, %vm725
        %vm742 = vmor %vm709, %vm726
        %vm743 = vmor %vm710, %vm727
        %vm744 = vmor %vm711, %vm728
        %vm745 = vmor %vm712, %vm729
        %vm746 = vmor %vm713, %vm730
        %vm747 = vmor %vm714, %vm731
        %vm748 = vmor %vm715, %vm732
        %vm749 = vmor %vm716, %vm733
        %vm750 = vmor %vm717, %vm734
        %v751 = vsel %vm735, 1, 0
        %v752 = vsel %vm736, 1, 0
        %v753 = vsel %vm737, 1, 0
        %v754 = vsel %vm738, 1, 0
        %v755 = vsel %vm739, 1, 0
        %v756 = vsel %vm740, 1, 0
        %v757 = vsel %vm741, 1, 0
        %v758 = vsel %vm742, 1, 0
        %v759 = vsel %vm743, 1, 0
        %v760 = vsel %vm744, 1, 0
        %v761 = vsel %vm745, 1, 0
        %v762 = vsel %vm746, 1, 0
        %v763 = vsel %vm747, 1, 0
        %v764 = vsel %vm748, 1, 0
        %v765 = vsel %vm749, 1, 0
        %v766 = vsel %vm750, 1, 0
        %v767 = vcvt.s32.f32 %v751
        %v768 = vcvt.s32.f32 %v752
        %v769 = vcvt.s32.f32 %v753
        %v770 = vcvt.s32.f32 %v754
        %v771 = vcvt.s32.f32 %v755
        %v772 = vcvt.s32.f32 %v756
        %v773 = vcvt.s32.f32 %v757
        %v774 = vcvt.s32.f32 %v758
        %v775 = vcvt.s32.f32 %v759
        %v776 = vcvt.s32.f32 %v760
        %v777 = vcvt.s32.f32 %v761
        %v778 = vcvt.s32.f32 %v762
        %v779 = vcvt.s32.f32 %v763
        %v780 = vcvt.s32.f32 %v764
        %v781 = vcvt.s32.f32 %v765
        %v782 = vcvt.s32.f32 %v766
        %v783 = vld [vmem:[#allocation2 + $0x4] sm:$0x1]
        %784 = vmatpush.msra.mxu0 %v782
        %785 = vmatpush.msra.mxu0 %v781
        %786 = vmatpush.msra.mxu0 %v780
        %787 = vmatpush.msra.mxu0 %v779
        %788 = vmatpush.msra.mxu0 %v778
        %789 = vmatpush.msra.mxu0 %v777
        %790 = vmatpush.msra.mxu0 %v776
        %791 = vmatpush.msra.mxu0 %v775
        %792 = vmatpush.msra.mxu0 %v774
        %793 = vmatpush.msra.mxu0 %v773
        %794 = vmatpush.msra.mxu0 %v772
        %795 = vmatpush.msra.mxu0 %v771
        %796 = vmatpush.msra.mxu0 %v770
        %797 = vmatpush.msra.mxu0 %v769
        %798 = vmatpush.msra.mxu0 %v768
        %799 = vmatpush.msra.mxu0 %v767
        %800 = vmatmul.f32.gmra.mxu0 %v235
        %v801 = vpop.f32.mrf.mxu0
        %v802 = vadd.f32 0.0, %v801
        %803 = vdwg.mxu0
        %v804 = vadd.f32 %v783, %v802
        %805 = vst [vmem:[#allocation2 + $0x4] sm:$0x1] %v804
        %v806 = vld [vmem:[#allocation3 + $0x5] sm:$0x1]
        %v807 = vld [vmem:[#allocation6 + $0x5] sm:$0x1]
        %v808 = vperm.slane %v806, 0
        %vm809 = vcmp.eq.s32.totalorder %v255, %v808
        %vm810 = vcmp.eq.s32.totalorder %v256, %v808
        %vm811 = vcmp.eq.s32.totalorder %v257, %v808
        %vm812 = vcmp.eq.s32.totalorder %v258, %v808
        %vm813 = vcmp.eq.s32.totalorder %v259, %v808
        %vm814 = vcmp.eq.s32.totalorder %v260, %v808
        %vm815 = vcmp.eq.s32.totalorder %v261, %v808
        %vm816 = vcmp.eq.s32.totalorder %v262, %v808
        %vm817 = vcmp.eq.s32.totalorder %v263, %v808
        %vm818 = vcmp.eq.s32.totalorder %v264, %v808
        %vm819 = vcmp.eq.s32.totalorder %v265, %v808
        %vm820 = vcmp.eq.s32.totalorder %v266, %v808
        %vm821 = vcmp.eq.s32.totalorder %v267, %v808
        %vm822 = vcmp.eq.s32.totalorder %v268, %v808
        %vm823 = vcmp.eq.s32.totalorder %v269, %v808
        %vm824 = vcmp.eq.s32.totalorder %v270, %v808
        %v825 = vperm.slane %v807, 0
        %vm826 = vcmp.eq.s32.totalorder %v255, %v825
        %vm827 = vcmp.eq.s32.totalorder %v256, %v825
        %vm828 = vcmp.eq.s32.totalorder %v257, %v825
        %vm829 = vcmp.eq.s32.totalorder %v258, %v825
        %vm830 = vcmp.eq.s32.totalorder %v259, %v825
        %vm831 = vcmp.eq.s32.totalorder %v260, %v825
        %vm832 = vcmp.eq.s32.totalorder %v261, %v825
        %vm833 = vcmp.eq.s32.totalorder %v262, %v825
        %vm834 = vcmp.eq.s32.totalorder %v263, %v825
        %vm835 = vcmp.eq.s32.totalorder %v264, %v825
        %vm836 = vcmp.eq.s32.totalorder %v265, %v825
        %vm837 = vcmp.eq.s32.totalorder %v266, %v825
        %vm838 = vcmp.eq.s32.totalorder %v267, %v825
        %vm839 = vcmp.eq.s32.totalorder %v268, %v825
        %vm840 = vcmp.eq.s32.totalorder %v269, %v825
        %vm841 = vcmp.eq.s32.totalorder %v270, %v825
        %vm842 = vmor %vm809, %vm826
        %vm843 = vmor %vm810, %vm827
        %vm844 = vmor %vm811, %vm828
        %vm845 = vmor %vm812, %vm829
        %vm846 = vmor %vm813, %vm830
        %vm847 = vmor %vm814, %vm831
        %vm848 = vmor %vm815, %vm832
        %vm849 = vmor %vm816, %vm833
        %vm850 = vmor %vm817, %vm834
        %vm851 = vmor %vm818, %vm835
        %vm852 = vmor %vm819, %vm836
        %vm853 = vmor %vm820, %vm837
        %vm854 = vmor %vm821, %vm838
        %vm855 = vmor %vm822, %vm839
        %vm856 = vmor %vm823, %vm840
        %vm857 = vmor %vm824, %vm841
        %v858 = vsel %vm842, 1, 0
        %v859 = vsel %vm843, 1, 0
        %v860 = vsel %vm844, 1, 0
        %v861 = vsel %vm845, 1, 0
        %v862 = vsel %vm846, 1, 0
        %v863 = vsel %vm847, 1, 0
        %v864 = vsel %vm848, 1, 0
        %v865 = vsel %vm849, 1, 0
        %v866 = vsel %vm850, 1, 0
        %v867 = vsel %vm851, 1, 0
        %v868 = vsel %vm852, 1, 0
        %v869 = vsel %vm853, 1, 0
        %v870 = vsel %vm854, 1, 0
        %v871 = vsel %vm855, 1, 0
        %v872 = vsel %vm856, 1, 0
        %v873 = vsel %vm857, 1, 0
        %v874 = vcvt.s32.f32 %v858
        %v875 = vcvt.s32.f32 %v859
        %v876 = vcvt.s32.f32 %v860
        %v877 = vcvt.s32.f32 %v861
        %v878 = vcvt.s32.f32 %v862
        %v879 = vcvt.s32.f32 %v863
        %v880 = vcvt.s32.f32 %v864
        %v881 = vcvt.s32.f32 %v865
        %v882 = vcvt.s32.f32 %v866
        %v883 = vcvt.s32.f32 %v867
        %v884 = vcvt.s32.f32 %v868
        %v885 = vcvt.s32.f32 %v869
        %v886 = vcvt.s32.f32 %v870
        %v887 = vcvt.s32.f32 %v871
        %v888 = vcvt.s32.f32 %v872
        %v889 = vcvt.s32.f32 %v873
        %v890 = vld [vmem:[#allocation2 + $0x5] sm:$0x1]
        %891 = vmatpush.msra.mxu0 %v889
        %892 = vmatpush.msra.mxu0 %v888
        %893 = vmatpush.msra.mxu0 %v887
        %894 = vmatpush.msra.mxu0 %v886
        %895 = vmatpush.msra.mxu0 %v885
        %896 = vmatpush.msra.mxu0 %v884
        %897 = vmatpush.msra.mxu0 %v883
        %898 = vmatpush.msra.mxu0 %v882
        %899 = vmatpush.msra.mxu0 %v881
        %900 = vmatpush.msra.mxu0 %v880
        %901 = vmatpush.msra.mxu0 %v879
        %902 = vmatpush.msra.mxu0 %v878
        %903 = vmatpush.msra.mxu0 %v877
        %904 = vmatpush.msra.mxu0 %v876
        %905 = vmatpush.msra.mxu0 %v875
        %906 = vmatpush.msra.mxu0 %v874
        %907 = vmatmul.f32.gmra.mxu0 %v235
        %v908 = vpop.f32.mrf.mxu0
        %v909 = vadd.f32 0.0, %v908
        %910 = vdwg.mxu0
        %v911 = vadd.f32 %v890, %v909
        %912 = vst [vmem:[#allocation2 + $0x5] sm:$0x1] %v911
        %v913 = vld [vmem:[#allocation3 + $0x6] sm:$0x1]
        %v914 = vld [vmem:[#allocation6 + $0x6] sm:$0x1]
        %v915 = vperm.slane %v913, 0
        %vm916 = vcmp.eq.s32.totalorder %v255, %v915
        %vm917 = vcmp.eq.s32.totalorder %v256, %v915
        %vm918 = vcmp.eq.s32.totalorder %v257, %v915
        %vm919 = vcmp.eq.s32.totalorder %v258, %v915
        %vm920 = vcmp.eq.s32.totalorder %v259, %v915
        %vm921 = vcmp.eq.s32.totalorder %v260, %v915
        %vm922 = vcmp.eq.s32.totalorder %v261, %v915
        %vm923 = vcmp.eq.s32.totalorder %v262, %v915
        %vm924 = vcmp.eq.s32.totalorder %v263, %v915
        %vm925 = vcmp.eq.s32.totalorder %v264, %v915
        %vm926 = vcmp.eq.s32.totalorder %v265, %v915
        %vm927 = vcmp.eq.s32.totalorder %v266, %v915
        %vm928 = vcmp.eq.s32.totalorder %v267, %v915
        %vm929 = vcmp.eq.s32.totalorder %v268, %v915
        %vm930 = vcmp.eq.s32.totalorder %v269, %v915
        %vm931 = vcmp.eq.s32.totalorder %v270, %v915
        %v932 = vperm.slane %v914, 0
        %vm933 = vcmp.eq.s32.totalorder %v255, %v932
        %vm934 = vcmp.eq.s32.totalorder %v256, %v932
        %vm935 = vcmp.eq.s32.totalorder %v257, %v932
        %vm936 = vcmp.eq.s32.totalorder %v258, %v932
        %vm937 = vcmp.eq.s32.totalorder %v259, %v932
        %vm938 = vcmp.eq.s32.totalorder %v260, %v932
        %vm939 = vcmp.eq.s32.totalorder %v261, %v932
        %vm940 = vcmp.eq.s32.totalorder %v262, %v932
        %vm941 = vcmp.eq.s32.totalorder %v263, %v932
        %vm942 = vcmp.eq.s32.totalorder %v264, %v932
        %vm943 = vcmp.eq.s32.totalorder %v265, %v932
        %vm944 = vcmp.eq.s32.totalorder %v266, %v932
        %vm945 = vcmp.eq.s32.totalorder %v267, %v932
        %vm946 = vcmp.eq.s32.totalorder %v268, %v932
        %vm947 = vcmp.eq.s32.totalorder %v269, %v932
        %vm948 = vcmp.eq.s32.totalorder %v270, %v932
        %vm949 = vmor %vm916, %vm933
        %vm950 = vmor %vm917, %vm934
        %vm951 = vmor %vm918, %vm935
        %vm952 = vmor %vm919, %vm936
        %vm953 = vmor %vm920, %vm937
        %vm954 = vmor %vm921, %vm938
        %vm955 = vmor %vm922, %vm939
        %vm956 = vmor %vm923, %vm940
        %vm957 = vmor %vm924, %vm941
        %vm958 = vmor %vm925, %vm942
        %vm959 = vmor %vm926, %vm943
        %vm960 = vmor %vm927, %vm944
        %vm961 = vmor %vm928, %vm945
        %vm962 = vmor %vm929, %vm946
        %vm963 = vmor %vm930, %vm947
        %vm964 = vmor %vm931, %vm948
        %v965 = vsel %vm949, 1, 0
        %v966 = vsel %vm950, 1, 0
        %v967 = vsel %vm951, 1, 0
        %v968 = vsel %vm952, 1, 0
        %v969 = vsel %vm953, 1, 0
        %v970 = vsel %vm954, 1, 0
        %v971 = vsel %vm955, 1, 0
        %v972 = vsel %vm956, 1, 0
        %v973 = vsel %vm957, 1, 0
        %v974 = vsel %vm958, 1, 0
        %v975 = vsel %vm959, 1, 0
        %v976 = vsel %vm960, 1, 0
        %v977 = vsel %vm961, 1, 0
        %v978 = vsel %vm962, 1, 0
        %v979 = vsel %vm963, 1, 0
        %v980 = vsel %vm964, 1, 0
        %v981 = vcvt.s32.f32 %v965
        %v982 = vcvt.s32.f32 %v966
        %v983 = vcvt.s32.f32 %v967
        %v984 = vcvt.s32.f32 %v968
        %v985 = vcvt.s32.f32 %v969
        %v986 = vcvt.s32.f32 %v970
        %v987 = vcvt.s32.f32 %v971
        %v988 = vcvt.s32.f32 %v972
        %v989 = vcvt.s32.f32 %v973
        %v990 = vcvt.s32.f32 %v974
        %v991 = vcvt.s32.f32 %v975
        %v992 = vcvt.s32.f32 %v976
        %v993 = vcvt.s32.f32 %v977
        %v994 = vcvt.s32.f32 %v978
        %v995 = vcvt.s32.f32 %v979
        %v996 = vcvt.s32.f32 %v980
        %v997 = vld [vmem:[#allocation2 + $0x6] sm:$0x1]
        %998 = vmatpush.msra.mxu0 %v996
        %999 = vmatpush.msra.mxu0 %v995
        %1000 = vmatpush.msra.mxu0 %v994
        %1001 = vmatpush.msra.mxu0 %v993
        %1002 = vmatpush.msra.mxu0 %v992
        %1003 = vmatpush.msra.mxu0 %v991
        %1004 = vmatpush.msra.mxu0 %v990
        %1005 = vmatpush.msra.mxu0 %v989
        %1006 = vmatpush.msra.mxu0 %v988
        %1007 = vmatpush.msra.mxu0 %v987
        %1008 = vmatpush.msra.mxu0 %v986
        %1009 = vmatpush.msra.mxu0 %v985
        %1010 = vmatpush.msra.mxu0 %v984
        %1011 = vmatpush.msra.mxu0 %v983
        %1012 = vmatpush.msra.mxu0 %v982
        %1013 = vmatpush.msra.mxu0 %v981
        %1014 = vmatmul.f32.gmra.mxu0 %v235
        %v1015 = vpop.f32.mrf.mxu0
        %v1016 = vadd.f32 0.0, %v1015
        %1017 = vdwg.mxu0
        %v1018 = vadd.f32 %v997, %v1016
        %1019 = vst [vmem:[#allocation2 + $0x6] sm:$0x1] %v1018
        %v1020 = vld [vmem:[#allocation3 + $0x7] sm:$0x1]
        %v1021 = vld [vmem:[#allocation6 + $0x7] sm:$0x1]
        %v1022 = vperm.slane %v1020, 0
        %vm1023 = vcmp.eq.s32.totalorder %v255, %v1022
        %vm1024 = vcmp.eq.s32.totalorder %v256, %v1022
        %vm1025 = vcmp.eq.s32.totalorder %v257, %v1022
        %vm1026 = vcmp.eq.s32.totalorder %v258, %v1022
        %vm1027 = vcmp.eq.s32.totalorder %v259, %v1022
        %vm1028 = vcmp.eq.s32.totalorder %v260, %v1022
        %vm1029 = vcmp.eq.s32.totalorder %v261, %v1022
        %vm1030 = vcmp.eq.s32.totalorder %v262, %v1022
        %vm1031 = vcmp.eq.s32.totalorder %v263, %v1022
        %vm1032 = vcmp.eq.s32.totalorder %v264, %v1022
        %vm1033 = vcmp.eq.s32.totalorder %v265, %v1022
        %vm1034 = vcmp.eq.s32.totalorder %v266, %v1022
        %vm1035 = vcmp.eq.s32.totalorder %v267, %v1022
        %vm1036 = vcmp.eq.s32.totalorder %v268, %v1022
        %vm1037 = vcmp.eq.s32.totalorder %v269, %v1022
        %vm1038 = vcmp.eq.s32.totalorder %v270, %v1022
        %v1039 = vperm.slane %v1021, 0
        %vm1040 = vcmp.eq.s32.totalorder %v255, %v1039
        %vm1041 = vcmp.eq.s32.totalorder %v256, %v1039
        %vm1042 = vcmp.eq.s32.totalorder %v257, %v1039
        %vm1043 = vcmp.eq.s32.totalorder %v258, %v1039
        %vm1044 = vcmp.eq.s32.totalorder %v259, %v1039
        %vm1045 = vcmp.eq.s32.totalorder %v260, %v1039
        %vm1046 = vcmp.eq.s32.totalorder %v261, %v1039
        %vm1047 = vcmp.eq.s32.totalorder %v262, %v1039
        %vm1048 = vcmp.eq.s32.totalorder %v263, %v1039
        %vm1049 = vcmp.eq.s32.totalorder %v264, %v1039
        %vm1050 = vcmp.eq.s32.totalorder %v265, %v1039
        %vm1051 = vcmp.eq.s32.totalorder %v266, %v1039
        %vm1052 = vcmp.eq.s32.totalorder %v267, %v1039
        %vm1053 = vcmp.eq.s32.totalorder %v268, %v1039
        %vm1054 = vcmp.eq.s32.totalorder %v269, %v1039
        %vm1055 = vcmp.eq.s32.totalorder %v270, %v1039
        %vm1056 = vmor %vm1023, %vm1040
        %vm1057 = vmor %vm1024, %vm1041
        %vm1058 = vmor %vm1025, %vm1042
        %vm1059 = vmor %vm1026, %vm1043
        %vm1060 = vmor %vm1027, %vm1044
        %vm1061 = vmor %vm1028, %vm1045
        %vm1062 = vmor %vm1029, %vm1046
        %vm1063 = vmor %vm1030, %vm1047
        %vm1064 = vmor %vm1031, %vm1048
        %vm1065 = vmor %vm1032, %vm1049
        %vm1066 = vmor %vm1033, %vm1050
        %vm1067 = vmor %vm1034, %vm1051
        %vm1068 = vmor %vm1035, %vm1052
        %vm1069 = vmor %vm1036, %vm1053
        %vm1070 = vmor %vm1037, %vm1054
        %vm1071 = vmor %vm1038, %vm1055
        %v1072 = vsel %vm1056, 1, 0
        %v1073 = vsel %vm1057, 1, 0
        %v1074 = vsel %vm1058, 1, 0
        %v1075 = vsel %vm1059, 1, 0
        %v1076 = vsel %vm1060, 1, 0
        %v1077 = vsel %vm1061, 1, 0
        %v1078 = vsel %vm1062, 1, 0
        %v1079 = vsel %vm1063, 1, 0
        %v1080 = vsel %vm1064, 1, 0
        %v1081 = vsel %vm1065, 1, 0
        %v1082 = vsel %vm1066, 1, 0
        %v1083 = vsel %vm1067, 1, 0
        %v1084 = vsel %vm1068, 1, 0
        %v1085 = vsel %vm1069, 1, 0
        %v1086 = vsel %vm1070, 1, 0
        %v1087 = vsel %vm1071, 1, 0
        %v1088 = vcvt.s32.f32 %v1072
        %v1089 = vcvt.s32.f32 %v1073
        %v1090 = vcvt.s32.f32 %v1074
        %v1091 = vcvt.s32.f32 %v1075
        %v1092 = vcvt.s32.f32 %v1076
        %v1093 = vcvt.s32.f32 %v1077
        %v1094 = vcvt.s32.f32 %v1078
        %v1095 = vcvt.s32.f32 %v1079
        %v1096 = vcvt.s32.f32 %v1080
        %v1097 = vcvt.s32.f32 %v1081
        %v1098 = vcvt.s32.f32 %v1082
        %v1099 = vcvt.s32.f32 %v1083
        %v1100 = vcvt.s32.f32 %v1084
        %v1101 = vcvt.s32.f32 %v1085
        %v1102 = vcvt.s32.f32 %v1086
        %v1103 = vcvt.s32.f32 %v1087
        %v1104 = vld [vmem:[#allocation2 + $0x7] sm:$0x1]
        %1105 = vmatpush.msra.mxu0 %v1103
        %1106 = vmatpush.msra.mxu0 %v1102
        %1107 = vmatpush.msra.mxu0 %v1101
        %1108 = vmatpush.msra.mxu0 %v1100
        %1109 = vmatpush.msra.mxu0 %v1099
        %1110 = vmatpush.msra.mxu0 %v1098
        %1111 = vmatpush.msra.mxu0 %v1097
        %1112 = vmatpush.msra.mxu0 %v1096
        %1113 = vmatpush.msra.mxu0 %v1095
        %1114 = vmatpush.msra.mxu0 %v1094
        %1115 = vmatpush.msra.mxu0 %v1093
        %1116 = vmatpush.msra.mxu0 %v1092
        %1117 = vmatpush.msra.mxu0 %v1091
        %1118 = vmatpush.msra.mxu0 %v1090
        %1119 = vmatpush.msra.mxu0 %v1089
        %1120 = vmatpush.msra.mxu0 %v1088
        %1121 = vmatmul.f32.gmra.mxu0 %v235
        %v1122 = vpop.f32.mrf.mxu0
        %v1123 = vadd.f32 0.0, %v1122
        %1124 = vdwg.mxu0
        %v1125 = vadd.f32 %v1104, %v1123
        %1126 = vst [vmem:[#allocation2 + $0x7] sm:$0x1] %v1125
        %p1127 = scmp.eq.s32.totalorder %s22, 1
        // Predicated region
        $region49: #{tpu_custom_call.1} parent=31 // pred_check
          %p1128 = pneg %p1127
        $region50: #{tpu_custom_call.1} parent=31 // pred_check_branch
          %1130 = sbr.rel (%p1128) target = $region52
        $region51: #{tpu_custom_call.1} parent=31 // pred_region
          %v1131 = vld [vmem:[#allocation2] sm:$0xff]
          %vm1132 = vcmp.gt.f32.partialorder %v1131, 0.0
          %v1133 = vmul.f32 %v1131, 0.2
          %v1134 = vsel %vm1132, %v1131, %v1133
          %1135 = vst [vmem:[#allocation9] sm:$0xff] %v1134
        $region52: #{tpu_custom_call.1} parent=31 // pred_fallthru
          _
        // Predicated region
        $region53: #{tpu_custom_call.1} parent=31 // pred_check
          %p1136 = pneg %p125
        $region54: #{tpu_custom_call.1} parent=31 // pred_check_branch
          %1138 = sbr.rel (%p1136) target = $region56
        $region55: #{tpu_custom_call.1} parent=31 // pred_region
          %1140 = vsyncadd [#allocation5], 0
          %s1141 = smul.addr %s21, 8
          %s1142 = scalar_lea.hbm %s3, %s1141
          %s1144 = sshll.u32 [#allocation9], 4
          %s1145 = int_to_ptr.vmem [resolvable:$true] %s1144
          %s1146 = sshll.u32 %s1142, 4
          %s1147 = int_to_ptr.hbm [resolvable:$true] %s1146
          %1149 = dma.vmem_to_hbm [thread:$0]  %s1145, 128, %s1147, [#allocation5]
        $region56: #{tpu_custom_call.1} parent=31 // pred_fallthru
          _
        // Predicated region
        $region57: #{tpu_custom_call.1} parent=31 // pred_check
          %p1150 = pneg %p125
        $region58: #{tpu_custom_call.1} parent=31 // pred_check_branch
          %1152 = sbr.rel (%p1150) target = $region60
        $region59: #{tpu_custom_call.1} parent=31 // pred_region
          %1154 = dma.done [#allocation5], 128
        $region60: #{tpu_custom_call.1} parent=31 // pred_fallthru
          _
      $region32: #{tpu_custom_call.1} parent=5 // pred_fallthru
        _
      %p1155 = scmp.le.s32.totalorder 2, %s12
      // Predicated region
      $region61: #{tpu_custom_call.1} parent=5 // pred_check
        %p1156 = pneg %p1155
      $region62: #{tpu_custom_call.1} parent=5 // pred_check_branch
        %1158 = sbr.rel (%p1156) target = $region64
      $region63: #{tpu_custom_call.1} parent=5 // pred_region
        %s1159 = ssub.s32 %s12, 2
      $region64: #{tpu_custom_call.1} parent=5 // pred_fallthru
        _
    $region6: #{tpu_custom_call.1} parent=1 // loop_footer
      %s16 = sadd.s32 1, %s12
    $region7: #{tpu_custom_call.1} parent=1 // loop_footer_branch
      %11 = sbr.rel target = $region3
    $region8: #{tpu_custom_call.1} parent=1 // loop_exit
      _
    %1160 = vsyncpa [#allocation4], 1
    %s1161 = scalar_lea.sflag [#allocation4], 1
    %1162 = vsyncpa %s1161, 1
    %1163 = vsyncpa [#allocation7], 1
    %1164 = vsyncpa [#allocation5], 1
    %s1165 = scalar_lea.sflag [#allocation5], 1
    %1166 = vsyncpa %s1165, 1

</llo_original>
